<compile_context>
chip_gen: v7x
topology: tpu7x:2x2x1
jax: 0.10.0
libtpu: 0.0.40
codegen_flags: <defaults>
</compile_context>

<pallas_src>
import math

import numpy as np
import jax
import jax.numpy as jnp
from jax.experimental import pallas as pl
from jax.experimental.pallas import tpu as pltpu

BN_EPS = 1e-5
TILE = 128                         # lane tile; terms never straddle a tile boundary
VMEM_LIMIT = 32 * 1024 * 1024      # <= scoped/physical VMEM on v5e/v6e/v7x for this demo
                                   # TODO(synk): re-derive per-layer residency for huge
                                   # ontologies on v7x (64 MiB physical VMEM).


def _round_up(x, m):
    return ((x + m - 1) // m) * m


def _compiler_params():
    return pltpu.CompilerParams(
        dimension_semantics=("parallel",),
        vmem_limit_bytes=VMEM_LIMIT,
    )


# ------------------------------- Pallas kernels ------------------------------- #

def _direct_kernel(x_ref, w_ref, b_ref, o_ref):
    # One 128-lane tile of the packed direct-input slab:
    #   slab[:, tile] = x @ W_dir[:, tile] + b_dir[tile]
    o_ref[...] = (
        jnp.dot(x_ref[...], w_ref[...], preferred_element_type=jnp.float32)
        + b_ref[...]
    )


def _make_layer_kernel(num_sources, batch_real):
    """Fused kernel for one ontology layer, one 128-lane tile per grid step.

    For every term whose hidden columns live in this tile:
        z   = sum_s src_slab_s @ W_s[:, tile] + b[tile]     (row-split weights == concat)
        t   = tanh(z)
        bn  = BatchNorm1d(train mode; stats over real batch rows only)
        a1  = tanh(bn @ A1[tile] + ab1[tile])               (all aux-1 heads at once, MXU)
        aux = a1 * aw2[tile] + ab2[tile]                    (Linear(1,1), elementwise FMA)
    """

    def kernel(*refs):
        srcs = refs[:num_sources]
        ws = refs[num_sources:2 * num_sources]
        (b_ref, g_ref, be_ref, a1w_ref, ab1_ref, aw2_ref, ab2_ref,
         nn_ref, aux_ref) = refs[2 * num_sources:]

        # linear over all source slabs
        z = b_ref[...]
        for s in range(num_sources):
            z = z + jnp.dot(srcs[s][...], ws[s][...],
                            preferred_element_type=jnp.float32)
        t = jnp.tanh(z)

        # BatchNorm1d training mode (biased batch variance), masked to real rows
        rows = jax.lax.broadcasted_iota(jnp.int32, t.shape, 0)
        mask = (rows < batch_real).astype(jnp.float32)
        inv_n = 1.0 / float(batch_real)
        mean = jnp.sum(t * mask, axis=0, keepdims=True) * inv_n
        cent = (t - mean) * mask
        var = jnp.sum(cent * cent, axis=0, keepdims=True) * inv_n
        bn = g_ref[...] * (t - mean) * jax.lax.rsqrt(var + BN_EPS) + be_ref[...]
        nn_ref[...] = bn

        # aux heads: one wide matmul for all terms in this tile
        a1 = jnp.tanh(
            jnp.dot(bn, a1w_ref[...], preferred_element_type=jnp.float32)
            + ab1_ref[...]
        )
        aux_ref[...] = a1 * aw2_ref[...] + ab2_ref[...]

    return kernel


# ------------------------------- kernel wrappers ------------------------------ #

def direct_input_slab(x_pad, w_dir, b_dir):
    b_padded, feat = x_pad.shape
    e_pad = w_dir.shape[1]
    n_tiles = e_pad // TILE
    return pl.pallas_call(
        _direct_kernel,
        out_shape=jax.ShapeDtypeStruct((b_padded, e_pad), jnp.float32),
        grid=(n_tiles,),
        in_specs=[
            pl.BlockSpec((b_padded, feat), lambda j: (0, 0)),
            pl.BlockSpec((feat, TILE), lambda j: (0, j)),
            pl.BlockSpec((1, TILE), lambda j: (0, j)),
        ],
        out_specs=pl.BlockSpec((b_padded, TILE), lambda j: (0, j)),
        compiler_params=_compiler_params(),
    )(x_pad, w_dir, b_dir)


def layer_forward(src_slabs, src_ws, b, gamma, beta, a1w, ab1, aw2, ab2, *, batch_real):
    b_padded = src_slabs[0].shape[0]
    h_pad = b.shape[1]
    auxw = ab1.shape[1]
    n_tiles = h_pad // TILE
    num_sources = len(src_slabs)

    in_specs = []
    for s in src_slabs:                                   # full source slab each step
        in_specs.append(pl.BlockSpec((b_padded, s.shape[1]), lambda j: (0, 0)))
    for w in src_ws:                                      # weight columns of this tile
        in_specs.append(pl.BlockSpec((w.shape[0], TILE), lambda j: (0, j)))
    for _ in range(3):                                    # b, gamma, beta
        in_specs.append(pl.BlockSpec((1, TILE), lambda j: (0, j)))
    in_specs.append(pl.BlockSpec((TILE, TILE), lambda j: (0, j)))   # A1 (tile-local rows)
    for _ in range(3):                                    # ab1, aw2, ab2
        in_specs.append(pl.BlockSpec((1, TILE), lambda j: (0, j)))

    out_specs = (
        pl.BlockSpec((b_padded, TILE), lambda j: (0, j)),   # NN-out slab tile
        pl.BlockSpec((b_padded, TILE), lambda j: (0, j)),   # aux slab tile (lane-dense)
    )
    out_shape = (
        jax.ShapeDtypeStruct((b_padded, h_pad), jnp.float32),
        jax.ShapeDtypeStruct((b_padded, auxw), jnp.float32),
    )
    return pl.pallas_call(
        _make_layer_kernel(num_sources, batch_real),
        out_shape=out_shape,
        grid=(n_tiles,),
        in_specs=in_specs,
        out_specs=out_specs,
        compiler_params=_compiler_params(),
    )(*src_slabs, *src_ws, b, gamma, beta, a1w, ab1, aw2, ab2)


# ----------------------------------- model ------------------------------------ #

class DCellNetPallas:
    """Pallas re-implementation of DCellNet.forward with layer-level fusion."""

    def __init__(self, term_size_map, term_element_map, term_child_map,
                 num_elements, root, min_neurons_per_term=15, seed=0):
        self.root = root
        self.feature_dim = num_elements
        self.term_element_map = {t: sorted(e) for t, e in term_element_map.items()}
        self.term_child_map = {t: list(c) for t, c in term_child_map.items()}
        self.term_dim_map = {
            t: max(min_neurons_per_term, int(0.3 * s))
            for t, s in term_size_map.items()
        }

        # topological layering (leaves first), mirroring construct_NN_graph
        remaining = set(self.term_child_map.keys())
        self.term_layer_list = []
        while remaining:
            leaves = sorted(t for t in remaining
                            if not any(c in remaining for c in self.term_child_map[t]))
            self.term_layer_list.append(leaves)
            remaining -= set(leaves)
        self.layer_of = {t: li for li, layer in enumerate(self.term_layer_list)
                         for t in layer}

        rng = np.random.default_rng(seed)

        # ---------- packed direct-input layers -> one [feature_dim, E_pad] weight ----
        self.dir_off = {}
        off = 0
        for term in sorted(self.term_element_map.keys()):
            self.dir_off[term] = off
            off += len(self.term_element_map[term])
        self.e_total = off
        self.e_pad = _round_up(max(off, 1), TILE)

        w_dir = np.zeros((self.feature_dim, self.e_pad), np.float32)
        b_dir = np.zeros((1, self.e_pad), np.float32)
        self.raw_direct = {}
        bound = 1.0 / math.sqrt(self.feature_dim)
        for term in sorted(self.term_element_map.keys()):
            n_el = len(self.term_element_map[term])
            wd = rng.uniform(-bound, bound, (self.feature_dim, n_el)).astype(np.float32)
            bd = rng.uniform(-bound, bound, (n_el,)).astype(np.float32)
            o = self.dir_off[term]
            w_dir[:, o:o + n_el] = wd
            b_dir[0, o:o + n_el] = bd
            self.raw_direct[term] = (jnp.asarray(wd), jnp.asarray(bd))
        self.w_dir = jnp.asarray(w_dir)
        self.b_dir = jnp.asarray(b_dir)

        # ---------- packed per-layer parameters ----------
        self.layer_meta = []
        self.layer_params = []
        self.raw_terms = {}   # unpacked per-term params for the pure-JAX reference

        for li, layer in enumerate(self.term_layer_list):
            # hidden-column packing: no term straddles a 128-lane tile boundary
            h_off, aux_col = {}, {}
            off = 0
            for term in layer:
                h = self.term_dim_map[term]
                if off % TILE + h > TILE:
                    off = _round_up(off, TILE)
                h_off[term] = off
                off += h
            h_pad = _round_up(max(off, 1), TILE)
            n_tiles = h_pad // TILE
            auxw = n_tiles * TILE

            per_tile_count = {}
            for term in layer:
                tidx = h_off[term] // TILE
                k = per_tile_count.get(tidx, 0)
                aux_col[term] = tidx * TILE + k
                per_tile_count[tidx] = k + 1

            # which slabs feed this layer
            src_keys = []
            for term in layer:
                for c in self.term_child_map[term]:
                    key = ("layer", self.layer_of[c])
                    if key not in src_keys:
                        src_keys.append(key)
                if term in self.term_element_map and ("dir",) not in src_keys:
                    src_keys.append(("dir",))

            def src_width(key):
                if key == ("dir",):
                    return self.e_pad
                return self.layer_meta[key[1]]["h_pad"]

            w_src = {k: np.zeros((src_width(k), h_pad), np.float32) for k in src_keys}
            b_l = np.zeros((1, h_pad), np.float32)
            gamma_l = np.ones((1, h_pad), np.float32)
            beta_l = np.zeros((1, h_pad), np.float32)
            a1_l = np.zeros((TILE, auxw), np.float32)
            ab1_l = np.zeros((1, auxw), np.float32)
            aw2_l = np.zeros((1, auxw), np.float32)
            ab2_l = np.zeros((1, auxw), np.float32)

            for term in layer:
                hidden = self.term_dim_map[term]
                h0 = h_off[term]
                children = self.term_child_map[term]
                n_el = len(self.term_element_map.get(term, ()))
                input_size = sum(self.term_dim_map[c] for c in children) + n_el
                bnd = 1.0 / math.sqrt(input_size)
                wt = rng.uniform(-bnd, bnd, (input_size, hidden)).astype(np.float32)
                bt = rng.uniform(-bnd, bnd, (hidden,)).astype(np.float32)

                r = 0
                for c in children:
                    dc = self.term_dim_map[c]
                    lj = self.layer_of[c]
                    coff = self.layer_meta[lj]["h_off"][c]
                    w_src[("layer", lj)][coff:coff + dc, h0:h0 + hidden] = wt[r:r + dc]
                    r += dc
                if n_el:
                    o = self.dir_off[term]
                    w_src[("dir",)][o:o + n_el, h0:h0 + hidden] = wt[r:r + n_el]
                    r += n_el
                b_l[0, h0:h0 + hidden] = bt

                bnd1 = 1.0 / math.sqrt(hidden)
                aw1 = rng.uniform(-bnd1, bnd1, (hidden, 1)).astype(np.float32)
                ab1 = np.float32(rng.uniform(-bnd1, bnd1))
                aw2 = np.float32(rng.uniform(-1.0, 1.0))
                ab2 = np.float32(rng.uniform(-1.0, 1.0))
                ac = aux_col[term]
                tloc = h0 - (h0 // TILE) * TILE
                a1_l[tloc:tloc + hidden, ac] = aw1[:, 0]
                ab1_l[0, ac] = ab1
                aw2_l[0, ac] = aw2
                ab2_l[0, ac] = ab2

                self.raw_terms[term] = dict(
                    w=jnp.asarray(wt), b=jnp.asarray(bt),
                    aw1=jnp.asarray(aw1), ab1=jnp.asarray(ab1),
                    aw2=jnp.asarray(aw2), ab2=jnp.asarray(ab2),
                )

            self.layer_meta.append(dict(h_off=h_off, aux_col=aux_col,
                                        h_pad=h_pad, auxw=auxw, src_keys=src_keys))
            self.layer_params.append(dict(
                W={k: jnp.asarray(v) for k, v in w_src.items()},
                b=jnp.asarray(b_l), gamma=jnp.asarray(gamma_l), beta=jnp.asarray(beta_l),
                a1w=jnp.asarray(a1_l), ab1=jnp.asarray(ab1_l),
                aw2=jnp.asarray(aw2_l), ab2=jnp.asarray(ab2_l)))

    # ----------------------------- fused forward ----------------------------- #
    def forward(self, x):
        batch = x.shape[0]
        b_pad = max(8, _round_up(batch, 8))               # pad M to full sublanes
        x_pad = jnp.pad(x.astype(jnp.float32), ((0, b_pad - batch), (0, 0)))

        slabs = {("dir",): direct_input_slab(x_pad, self.w_dir, self.b_dir)}

        aux_out_map, term_NN_out_map = {}, {}
        for li, layer in enumerate(self.term_layer_list):
            meta = self.layer_meta[li]
            p = self.layer_params[li]
            src_keys = meta["src_keys"]
            srcs = [slabs[k] for k in src_keys]
            ws = [p["W"][k] for k in src_keys]
            nn_slab, aux_slab = layer_forward(
                srcs, ws, p["b"], p["gamma"], p["beta"],
                p["a1w"], p["ab1"], p["aw2"], p["ab2"], batch_real=batch)
            slabs[("layer", li)] = nn_slab
            for term in layer:
                h0 = meta["h_off"][term]
                h = self.term_dim_map[term]
                ac = meta["aux_col"][term]
                term_NN_out_map[term] = nn_slab[:batch, h0:h0 + h]
                aux_out_map[term] = aux_slab[:batch, ac:ac + 1]
        return aux_out_map, term_NN_out_map

    # ------------------ pure-JAX reference (mirrors the PyTorch code) -------- #
    def reference_forward(self, x):
        x = x.astype(jnp.float32)
        hi = jax.lax.Precision.HIGHEST
        term_out = {t: jnp.dot(x, w, precision=hi) + b
                    for t, (w, b) in self.raw_direct.items()}
        nn_out, aux_out = {}, {}
        for layer in self.term_layer_list:
            for term in layer:
                parts = [nn_out[c] for c in self.term_child_map[term]]
                if term in self.term_element_map:
                    parts.append(term_out[term])
                child_input = jnp.concatenate(parts, axis=1)
                p = self.raw_terms[term]
                t = jnp.tanh(jnp.dot(child_input, p["w"], precision=hi) + p["b"])
                mean = jnp.mean(t, axis=0, keepdims=True)
                var = jnp.mean((t - mean) ** 2, axis=0, keepdims=True)
                bn = (t - mean) * jax.lax.rsqrt(var + BN_EPS)   # gamma=1, beta=0
                nn_out[term] = bn
                a1 = jnp.tanh(jnp.dot(bn, p["aw1"], precision=hi) + p["ab1"])
                aux_out[term] = a1 * p["aw2"] + p["ab2"]
        return aux_out, nn_out


# ------------------------------------ main ------------------------------------ #

if __name__ == "__main__":
    batch = 2
    num_elements = 16

    # Small synthetic ontology:  root -> {A, B};  A, B are leaves.
    term_size_map = {"A": 10, "B": 20, "root": 60}       # -> hidden dims 15, 15, 18
    term_element_map = {
        "A": {0, 1, 2, 3, 4, 5},
        "B": {6, 7, 8, 9, 10},
        "root": {11, 12, 13, 14},
    }
    term_child_map = {"A": [], "B": [], "root": ["A", "B"]}

    model = DCellNetPallas(term_size_map, term_element_map, term_child_map,
                           num_elements=num_elements, root="root", seed=0)

    x = jax.random.normal(jax.random.PRNGKey(0), (batch, num_elements), jnp.float32)

    aux_out_map, term_NN_out_map = model.forward(x)
    jax.block_until_ready((aux_out_map, term_NN_out_map))

    # shape sanity checks
    assert term_NN_out_map["A"].shape == (batch, 15)
    assert term_NN_out_map["B"].shape == (batch, 15)
    assert term_NN_out_map["root"].shape == (batch, 18)
    for t in aux_out_map:
        assert aux_out_map[t].shape == (batch, 1)

    # numerical check vs. pure-JAX reference of the PyTorch forward
    ref_aux, ref_nn = model.reference_forward(x)
    for t in term_NN_out_map:
        np.testing.assert_allclose(np.asarray(term_NN_out_map[t]), np.asarray(ref_nn[t]),
                                   rtol=2e-2, atol=2e-2)
        np.testing.assert_allclose(np.asarray(aux_out_map[t]), np.asarray(ref_aux[t]),
                                   rtol=2e-2, atol=2e-2)

    print("KERNEL_OK")
</pallas_src>

<mosaic_0001>
module attributes {stable_mosaic.version = 11 : i64} {
  func.func @_direct_kernel(%arg0: i32, %arg1: memref<8x16xf32, #tpu.memory_space<vmem>>, %arg2: memref<16x128xf32, #tpu.memory_space<vmem>>, %arg3: memref<1x128xf32, #tpu.memory_space<vmem>>, %arg4: memref<8x128xf32, #tpu.memory_space<vmem>>) attributes {dimension_semantics = [#tpu.dimension_semantics<parallel>], iteration_bounds = array<i64: 1>, scalar_prefetch = 0 : i64, scratch_operands = 0 : i64, tpu.core_type = #tpu.core_type<tc>, window_params = [{pipeline_mode = #tpu.pipeline_mode<synchronous>, transform_indices = @transform_0, window_bounds = array<i64: 8, 16>}, {transform_indices = @transform_1, window_bounds = array<i64: 16, 128>}, {transform_indices = @transform_2, window_bounds = array<i64: 1, 128>}, {transform_indices = @transform_3, window_bounds = array<i64: 8, 128>}]} {
    %c0 = arith.constant 0 : index
    %c0_0 = arith.constant 0 : index
    %0 = vector.load %arg1[%c0, %c0_0] : memref<8x16xf32, #tpu.memory_space<vmem>>, vector<8x16xf32>
    %c0_1 = arith.constant 0 : index
    %c0_2 = arith.constant 0 : index
    %1 = vector.load %arg2[%c0_1, %c0_2] : memref<16x128xf32, #tpu.memory_space<vmem>>, vector<16x128xf32>
    %cst = arith.constant dense<0.000000e+00> : vector<8x128xf32>
    %2 = tpu.matmul %0, %1, %cst {dimension_numbers = #tpu.dot_dimension_numbers<[1], [0], [0], [1], [0, 0, 1, 1], [], []>} : vector<8x16xf32>, vector<16x128xf32>, vector<8x128xf32> -> vector<8x128xf32>
    %c0_3 = arith.constant 0 : index
    %c0_4 = arith.constant 0 : index
    %3 = vector.load %arg3[%c0_3, %c0_4] : memref<1x128xf32, #tpu.memory_space<vmem>>, vector<1x128xf32>
    %4 = vector.broadcast %3 : vector<1x128xf32> to vector<8x128xf32>
    %5 = arith.addf %2, %4 : vector<8x128xf32>
    %c0_5 = arith.constant 0 : index
    %c0_6 = arith.constant 0 : index
    %6 = vector.load %arg4[%c0_5, %c0_6] : memref<8x128xf32, #tpu.memory_space<vmem>>, vector<8x128xf32>
    tpu.vector_store %arg4[%c0_5, %c0_6], %5 {strides = array<i32>} : memref<8x128xf32, #tpu.memory_space<vmem>>, vector<8x128xf32>,
    return
  }
  func.func @transform_0(%arg0: i32) -> (i32, i32) {
    %c0_i32 = arith.constant 0 : i32
    %c0_i32_0 = arith.constant 0 : i32
    %c0_i32_1 = arith.constant 0 : i32
    return %c0_i32, %c0_i32_0 : i32, i32
  }
  func.func @transform_1(%arg0: i32) -> (i32, i32) {
    %c0_i32 = arith.constant 0 : i32
    %c0_i32_0 = arith.constant 0 : i32
    return %c0_i32, %arg0 : i32, i32
  }
  func.func @transform_2(%arg0: i32) -> (i32, i32) {
    %c0_i32 = arith.constant 0 : i32
    %c0_i32_0 = arith.constant 0 : i32
    return %c0_i32, %arg0 : i32, i32
  }
  func.func @transform_3(%arg0: i32) -> (i32, i32) {
    %c0_i32 = arith.constant 0 : i32
    %c0_i32_0 = arith.constant 0 : i32
    return %c0_i32, %arg0 : i32, i32
  }
}

</mosaic_0001>

<llo_original>
// kernel: tpu_custom_call.1
$region0: #{tpu_custom_call.1}
  #allocation0 [shape = 'u32[]', space=smem, size = 0x4, offset = 0x4, fixed_abs, tag = 'smem constant byte address 0x4 - core index']
  #allocation1 [shape = 'u32[144,128]{1,0:T(1,128)}', space=vmem, size = 0x12000, scoped, tag = 'internal scratch']
  %s0 = inlined_call_operand.hbm [shape: f32[8,16], index: 0, kind: input, shape index: {}]
  %s1 = inlined_call_operand.hbm [shape: f32[16,128], index: 1, kind: input, shape index: {}]
  %s2 = inlined_call_operand.vmem [shape: f32[1,128], index: 2, kind: input, shape index: {}]
  %s3 = inlined_call_operand.hbm [shape: f32[8,128], index: 3, kind: output, shape index: {}]
  %s4 = sld [smem:[#allocation0]]
  $region30: #{tpu_custom_call.1} parent=0
    _
  %s6 = ssub.s32 1, %s4
  %s7 = scalar_select 0, %s6, %s4
  $region1: #{tpu_custom_call.1} parent=0
    #allocation2 [shape = 'u8[4096]{0}', space=vmem, size = 0x1000, scoped, tag = 'input window, operand 0, single buffered']
    #allocation3 [shape = 's32[1]{0}', space=sflag, size = 0x4, scoped, tag = 'scoped memory for tpu_custom_call.1']
    #allocation4 [shape = 's32[1]{0}', space=sflag, size = 0x4, scoped, tag = 'scoped memory for tpu_custom_call.1']
    #allocation5 [shape = 'u8[8192]{0}', space=vmem, size = 0x2000, scoped, tag = 'input window, operand 1, single buffered']
    #allocation6 [shape = 's32[1]{0}', space=sflag, size = 0x4, scoped, tag = 'scoped memory for tpu_custom_call.1']
    #allocation7 [shape = 'u8[4096]{0}', space=vmem, size = 0x1000, scoped, tag = 'output window, operand 0, single buffered']
    %8 = vsyncpa [#allocation3], 0
    %9 = vsyncpa [#allocation6], 0
    %10 = vsyncpa [#allocation4], 0
    // Predicated region
    $region2: #{tpu_custom_call.1} parent=1 // pred_check
      _
    $region3: #{tpu_custom_call.1} parent=1 // pred_check_branch
      %12 = sbr.rel (0) target = $region5
    $region4: #{tpu_custom_call.1} parent=1 // pred_region
      %s14 = ssub.s32 128, 128
      %15 = vsyncadd [#allocation3], %s14
      %s17 = sshll.u32 [#allocation2], 4
      %s18 = int_to_ptr.vmem [resolvable:$true] %s17
      %20 = dma.hbm_to_vmem [thread:$0]  %s0, 128, %s18, [#allocation3]
    $region5: #{tpu_custom_call.1} parent=1 // pred_fallthru
      _
    // Predicated region
    $region6: #{tpu_custom_call.1} parent=1 // pred_check
      _
    $region7: #{tpu_custom_call.1} parent=1 // pred_check_branch
      %22 = sbr.rel (0) target = $region9
    $region8: #{tpu_custom_call.1} parent=1 // pred_region
      %s24 = ssub.s32 256, 256
      %25 = vsyncadd [#allocation6], %s24
      %s26 = sshll.u32 [#allocation5], 4
      %s27 = int_to_ptr.vmem [resolvable:$true] %s26
      %32 = dma.hbm_to_vmem [thread:$0]  %s1, 256, %s27, [#allocation6], 128, 128, 8
    $region9: #{tpu_custom_call.1} parent=1 // pred_fallthru
      _
    // Predicated region
    $region10: #{tpu_custom_call.1} parent=1 // pred_check
      _
    $region11: #{tpu_custom_call.1} parent=1 // pred_check_branch
      %34 = sbr.rel (0) target = $region13
    $region12: #{tpu_custom_call.1} parent=1 // pred_region
      _
    $region13: #{tpu_custom_call.1} parent=1 // pred_fallthru
      _
    // Predicated region
    $region14: #{tpu_custom_call.1} parent=1 // pred_check
      _
    $region15: #{tpu_custom_call.1} parent=1 // pred_check_branch
      %36 = sbr.rel (0) target = $region17
    $region16: #{tpu_custom_call.1} parent=1 // pred_region
      %37 = dma.done [#allocation3], 128
    $region17: #{tpu_custom_call.1} parent=1 // pred_fallthru
      _
    // Predicated region
    $region18: #{tpu_custom_call.1} parent=1 // pred_check
      _
    $region19: #{tpu_custom_call.1} parent=1 // pred_check_branch
      %39 = sbr.rel (0) target = $region21
    $region20: #{tpu_custom_call.1} parent=1 // pred_region
      %40 = dma.done [#allocation6], 256
    $region21: #{tpu_custom_call.1} parent=1 // pred_fallthru
      _
    %v41 = vld [vmem:[#allocation2] sm:$0xff]
    %v42 = vld [vmem:[#allocation5] sm:$0xff]
    %v43 = vld [vmem:[#allocation5 + $0x8] sm:$0xff]
    %v44 = vld [vmem:[%s2] sm:$0x1]
    %v46 = vlaneseq
    %v47 = vshrl.u32 %v46, 7
    %v48 = vsub.s32 0, %v47
    %v49 = vrot.slane %v44, %v48
    %vm51 = vcmask 130048
    %v53 = vsel %vm51, %v41, 0
    %55 = vmatprep.subr.mxu0 0.0
    %56 = vmatpush1.msra.mxu0 %v42
    %57 = vmatprep.subr.mxu0 0.0
    %58 = vmatpush1.msra.mxu0 %v43
    %59 = vmatprep.subr.mxu0 0.0
    %60 = vmatpush1.msra.mxu0 0.0
    %61 = vmatprep.subr.mxu0 0.0
    %62 = vmatpush1.msra.mxu0 0.0
    %63 = vmatprep.subr.mxu0 0.0
    %64 = vmatpush1.msra.mxu0 0.0
    %65 = vmatprep.subr.mxu0 0.0
    %66 = vmatpush1.msra.mxu0 0.0
    %67 = vmatprep.subr.mxu0 0.0
    %68 = vmatpush1.msra.mxu0 0.0
    %69 = vmatprep.subr.mxu0 0.0
    %70 = vmatpush1.msra.mxu0 0.0
    %71 = vmatprep.subr.mxu0 0.0
    %72 = vmatpush1.msra.mxu0 0.0
    %73 = vmatprep.subr.mxu0 0.0
    %74 = vmatpush1.msra.mxu0 0.0
    %75 = vmatprep.subr.mxu0 0.0
    %76 = vmatpush1.msra.mxu0 0.0
    %77 = vmatprep.subr.mxu0 0.0
    %78 = vmatpush1.msra.mxu0 0.0
    %79 = vmatprep.subr.mxu0 0.0
    %80 = vmatpush1.msra.mxu0 0.0
    %81 = vmatprep.subr.mxu0 0.0
    %82 = vmatpush1.msra.mxu0 0.0
    %83 = vmatprep.subr.mxu0 0.0
    %84 = vmatpush1.msra.mxu0 0.0
    %85 = vmatprep.subr.mxu0 0.0
    %86 = vmatpush1.msra.mxu0 0.0
    %87 = vmatprep.subr.mxu0 0.0
    %88 = vmatpush1.msra.mxu0 0.0
    %89 = vmatprep.subr.mxu0 0.0
    %90 = vmatpush1.msra.mxu0 0.0
    %91 = vmatprep.subr.mxu0 0.0
    %92 = vmatpush1.msra.mxu0 0.0
    %93 = vmatprep.subr.mxu0 0.0
    %94 = vmatpush1.msra.mxu0 0.0
    %95 = vmatprep.subr.mxu0 0.0
    %96 = vmatpush1.msra.mxu0 0.0
    %97 = vmatprep.subr.mxu0 0.0
    %98 = vmatpush1.msra.mxu0 0.0
    %99 = vmatprep.subr.mxu0 0.0
    %100 = vmatpush1.msra.mxu0 0.0
    %101 = vmatprep.subr.mxu0 0.0
    %102 = vmatpush1.msra.mxu0 0.0
    %103 = vmatprep.subr.mxu0 0.0
    %104 = vmatpush1.msra.mxu0 0.0
    %105 = vmatprep.subr.mxu0 0.0
    %106 = vmatpush1.msra.mxu0 0.0
    %107 = vmatprep.subr.mxu0 0.0
    %108 = vmatpush1.msra.mxu0 0.0
    %109 = vmatprep.subr.mxu0 0.0
    %110 = vmatpush1.msra.mxu0 0.0
    %111 = vmatprep.subr.mxu0 0.0
    %112 = vmatpush1.msra.mxu0 0.0
    %113 = vmatprep.subr.mxu0 0.0
    %114 = vmatpush1.msra.mxu0 0.0
    %115 = vmatprep.subr.mxu0 0.0
    %116 = vmatpush1.msra.mxu0 0.0
    %117 = vmatprep.subr.mxu0 0.0
    %118 = vmatpush1.msra.mxu0 0.0
    %119 = vmatprep.mubr.f32.mxu0 0.0
    %120 = vmatmul.mubr.f32.gmra.mrb[0].mxu0 %v53
    %v121 = vpop.f32.mrb[0].mxu0
    %v122 = vadd.f32 %v49, %v121
    %v123 = vpop.f32.mrb[0].mxu0
    %124 = vdwg.mxu0
    %125 = vst [vmem:[#allocation7] sm:$0xff] %v122
    // Predicated region
    $region22: #{tpu_custom_call.1} parent=1 // pred_check
      _
    $region23: #{tpu_custom_call.1} parent=1 // pred_check_branch
      %127 = sbr.rel (0) target = $region25
    $region24: #{tpu_custom_call.1} parent=1 // pred_region
      %s129 = ssub.s32 128, 128
      %130 = vsyncadd [#allocation4], %s129
      %s132 = sshll.u32 [#allocation7], 4
      %s133 = int_to_ptr.vmem [resolvable:$true] %s132
      %135 = dma.vmem_to_hbm [thread:$0]  %s133, 128, %s3, [#allocation4]
    $region25: #{tpu_custom_call.1} parent=1 // pred_fallthru
      _
    // Predicated region
    $region26: #{tpu_custom_call.1} parent=1 // pred_check
      _
    $region27: #{tpu_custom_call.1} parent=1 // pred_check_branch
      %137 = sbr.rel (0) target = $region29
    $region28: #{tpu_custom_call.1} parent=1 // pred_region
      %138 = dma.done [#allocation4], 128
    $region29: #{tpu_custom_call.1} parent=1 // pred_fallthru
      _
    %139 = vsyncpa [#allocation3], 1
    %140 = vsyncpa [#allocation6], 1
    %141 = vsyncpa [#allocation4], 1

</llo_original>
